<compile_context>
chip_gen: v7x
topology: tpu7x:2x2x1
jax: 0.10.0
libtpu: 0.0.40
codegen_flags: <defaults>
</compile_context>

<pallas_src>
import functools

import jax
import jax.numpy as jnp
import numpy as np
from jax.experimental import pallas as pl
from jax.experimental.pallas import tpu as pltpu


def _round_up(v, m):
    return (v + m - 1) // m * m


def _dense_block_kernel(x_ref, w_ref, b_ref, o_ref, acc_ref, *, scale,
                        negative_slope, apply_lrelu):
    # x_ref: (tm, tk)   w_ref: (tk, tn)   b_ref: (1, tn)
    # o_ref: (tm, tn)   acc_ref: (tm, tn) f32 scratch
    k = pl.program_id(2)

    @pl.when(k == 0)
    def _():
        acc_ref[...] = jnp.zeros_like(acc_ref)

    acc_ref[...] += jnp.dot(x_ref[...], w_ref[...],
                            preferred_element_type=jnp.float32)

    @pl.when(k == pl.num_programs(2) - 1)
    def _():
        # Epilogue in f32: wscale + (pre-scaled) bias + LeakyReLU(0.2).
        y = acc_ref[...] * scale + b_ref[...]
        if apply_lrelu:
            y = jnp.where(y >= 0, y, negative_slope * y)
        o_ref[...] = y.astype(o_ref.dtype)


def dense_block(x, weight_t, bias, *, wscale_gain=float(np.sqrt(2.0)),
                wscale_lr_multiplier=0.01, activation_type='lrelu',
                block_m=256, block_n=256, block_k=512,
                compute_dtype=None, vmem_limit_bytes=None):
    """Pallas DenseBlock forward.

    Args:
      x:        (B, in_features) float32
      weight_t: (in_features, out_features) float32  (== PyTorch weight.T)
      bias:     (out_features,) float32              (WScaleLayer bias)
      block_m/block_n/block_k: tile sizes (M mult. of 8, N/K mult. of 128).
      compute_dtype: optional dtype for the MXU inputs (e.g. jnp.bfloat16);
        accumulation and epilogue stay in f32.
    """
    B, K = x.shape
    K2, N = weight_t.shape
    assert K2 == K, "weight_t must be (in_features, out_features)"
    assert block_m % 8 == 0, "block_m must be a multiple of 8"
    assert block_n % 128 == 0 and block_k % 128 == 0, \
        "block_n / block_k must be multiples of 128"

    out_dtype = x.dtype

    if compute_dtype is not None:
        x = x.astype(compute_dtype)
        weight_t = weight_t.astype(compute_dtype)

    fan_in = K * 1 * 1                     # kernel_size == 1
    scale = float(wscale_gain / np.sqrt(fan_in) * wscale_lr_multiplier)

    if activation_type == 'lrelu':
        apply_lrelu, negative_slope = True, 0.2
    elif activation_type == 'linear':
        apply_lrelu, negative_slope = False, 1.0
    else:
        raise NotImplementedError(
            f'Not implemented activation function: {activation_type}!')

    # Pre-scale bias once outside the kernel (WScaleLayer: bias * lr_mult).
    bias_scaled = (bias.astype(jnp.float32) *
                   jnp.float32(wscale_lr_multiplier))

    # Tile sizes clamped to the (padded) problem size.
    tm = min(block_m, _round_up(B, 8))
    tn = min(block_n, _round_up(N, 128))
    tk = min(block_k, _round_up(K, 128))
    m_pad = _round_up(B, tm)
    n_pad = _round_up(N, tn)
    k_pad = _round_up(K, tk)

    # Zero-pad to the tile grid (zeros along K contribute nothing to the dot;
    # padded rows/cols are sliced away below).
    if (m_pad, k_pad) != (B, K):
        x = jnp.pad(x, ((0, m_pad - B), (0, k_pad - K)))
    if (k_pad, n_pad) != (K, N):
        weight_t = jnp.pad(weight_t, ((0, k_pad - K), (0, n_pad - N)))
    if n_pad != N:
        bias_scaled = jnp.pad(bias_scaled, (0, n_pad - N))
    bias2d = bias_scaled.reshape(1, n_pad)

    grid = (m_pad // tm, n_pad // tn, k_pad // tk)

    # VMEM budget: double-buffered x/w/bias/out tiles + f32 accumulator.
    in_b = x.dtype.itemsize
    w_b = weight_t.dtype.itemsize
    out_b = jnp.dtype(out_dtype).itemsize
    vmem_est = (2 * tm * tk * in_b + 2 * tk * tn * w_b + 2 * tn * 4
                + 2 * tm * tn * out_b + tm * tn * 4)
    if vmem_limit_bytes is None:
        vmem_limit_bytes = int(min(max(2 * vmem_est, 32 * 1024 * 1024),
                                   64 * 1024 * 1024))

    kernel = functools.partial(
        _dense_block_kernel,
        scale=scale,
        negative_slope=negative_slope,
        apply_lrelu=apply_lrelu,
    )

    out = pl.pallas_call(
        kernel,
        out_shape=jax.ShapeDtypeStruct((m_pad, n_pad), out_dtype),
        grid_spec=pltpu.PrefetchScalarGridSpec(
            num_scalar_prefetch=0,
            grid=grid,
            in_specs=[
                # x: (tm, tk) tile over batch x reduction
                pl.BlockSpec((tm, tk), lambda i, j, k: (i, k)),
                # weight: (tk, tn) tile over reduction x out_features
                pl.BlockSpec((tk, tn), lambda i, j, k: (k, j)),
                # bias: (1, tn) lane-dense row slice
                pl.BlockSpec((1, tn), lambda i, j, k: (0, j)),
            ],
            out_specs=pl.BlockSpec((tm, tn), lambda i, j, k: (i, j)),
            scratch_shapes=[pltpu.VMEM((tm, tn), jnp.float32)],
        ),
        compiler_params=pltpu.CompilerParams(
            dimension_semantics=("parallel", "parallel", "arbitrary"),
            vmem_limit_bytes=vmem_limit_bytes),
    )(x, weight_t, bias2d)

    return out[:B, :N]


def dense_block_ref(x, weight_t, bias, *, wscale_gain=float(np.sqrt(2.0)),
                    wscale_lr_multiplier=0.01, activation_type='lrelu'):
    """Pure-JAX reference matching the PyTorch module."""
    fan_in = x.shape[1]
    scale = wscale_gain / np.sqrt(fan_in) * wscale_lr_multiplier
    y = x @ weight_t
    y = y * scale + bias[None, :] * wscale_lr_multiplier
    if activation_type == 'lrelu':
        y = jnp.where(y >= 0, y, 0.2 * y)
    return y


if __name__ == "__main__":
    key = jax.random.PRNGKey(0)
    k_x, k_w, k_b = jax.random.split(key, 3)

    # Small but non-aligned shapes so padding + the (M, N, K) grid are
    # actually exercised.
    batch = 40
    in_features = 160
    out_features = 320

    x = jax.random.normal(k_x, (batch, in_features), dtype=jnp.float32)
    # nn.Linear weight is (out_features, in_features); kept transposed here.
    weight_t = jax.random.normal(
        k_w, (in_features, out_features), dtype=jnp.float32) * 0.05
    # WScaleLayer bias is a trainable param (zeros at init); use random values
    # so the bias path is actually tested.
    bias = jax.random.normal(k_b, (out_features,), dtype=jnp.float32)

    ref = dense_block_ref(x, weight_t, bias)

    # 1) f32 path with small tiles -> multi-step (M=3, N=3, K=2) grid.
    out = dense_block(x, weight_t, bias, block_m=16, block_n=128, block_k=128)
    out = jax.block_until_ready(out)
    np.testing.assert_allclose(np.asarray(out), np.asarray(ref),
                               rtol=1e-5, atol=1e-5)

    # 2) default (large, lane-dense) tiles + bf16 MXU inputs (v6e/v7x path).
    out_bf16 = dense_block(x, weight_t, bias, compute_dtype=jnp.bfloat16)
    out_bf16 = jax.block_until_ready(out_bf16)
    np.testing.assert_allclose(np.asarray(out_bf16), np.asarray(ref),
                               rtol=5e-2, atol=5e-3)

    print("KERNEL_OK")
</pallas_src>

<mosaic_0001>
module attributes {stable_mosaic.version = 11 : i64} {
  func.func @_dense_block_kernel(%arg0: i32, %arg1: i32, %arg2: i32, %arg3: memref<16x128xf32, #tpu.memory_space<vmem>>, %arg4: memref<128x128xf32, #tpu.memory_space<vmem>>, %arg5: memref<1x128xf32, #tpu.memory_space<vmem>>, %arg6: memref<16x128xf32, #tpu.memory_space<vmem>>, %arg7: memref<16x128xf32, #tpu.memory_space<vmem>>) attributes {dimension_semantics = [#tpu.dimension_semantics<parallel>, #tpu.dimension_semantics<parallel>, #tpu.dimension_semantics<arbitrary>], iteration_bounds = array<i64: 3, 3, 2>, scalar_prefetch = 0 : i64, scratch_operands = 1 : i64, tpu.core_type = #tpu.core_type<tc>, window_params = [{transform_indices = @transform_0, window_bounds = array<i64: 16, 128>}, {transform_indices = @transform_1, window_bounds = array<i64: 128, 128>}, {transform_indices = @transform_2, window_bounds = array<i64: 1, 128>}, {transform_indices = @transform_3, window_bounds = array<i64: 16, 128>}]} {
    %c0_i32 = arith.constant 0 : i32
    %0 = arith.cmpi eq, %arg2, %c0_i32 : i32
    %1 = arith.extui %0 : i1 to i32
    %c0_i32_0 = arith.constant 0 : i32
    %2 = arith.cmpi ne, %1, %c0_i32_0 : i32
    scf.if %2 {
      %cst_9 = arith.constant 0.000000e+00 : f32
      %12 = vector.broadcast %cst_9 : f32 to vector<16x128xf32>
      %c0_10 = arith.constant 0 : index
      %c0_11 = arith.constant 0 : index
      %13 = vector.load %arg7[%c0_10, %c0_11] : memref<16x128xf32, #tpu.memory_space<vmem>>, vector<16x128xf32>
      tpu.vector_store %arg7[%c0_10, %c0_11], %12 {strides = array<i32>} : memref<16x128xf32, #tpu.memory_space<vmem>>, vector<16x128xf32>,
    } else {
    }
    %c0 = arith.constant 0 : index
    %c0_1 = arith.constant 0 : index
    %3 = vector.load %arg7[%c0, %c0_1] : memref<16x128xf32, #tpu.memory_space<vmem>>, vector<16x128xf32>
    %c0_2 = arith.constant 0 : index
    %c0_3 = arith.constant 0 : index
    %4 = vector.load %arg3[%c0_2, %c0_3] : memref<16x128xf32, #tpu.memory_space<vmem>>, vector<16x128xf32>
    %c0_4 = arith.constant 0 : index
    %c0_5 = arith.constant 0 : index
    %5 = vector.load %arg4[%c0_4, %c0_5] : memref<128x128xf32, #tpu.memory_space<vmem>>, vector<128x128xf32>
    %cst = arith.constant dense<0.000000e+00> : vector<16x128xf32>
    %6 = tpu.matmul %4, %5, %cst {dimension_numbers = #tpu.dot_dimension_numbers<[1], [0], [0], [1], [0, 0, 1, 1], [], []>} : vector<16x128xf32>, vector<128x128xf32>, vector<16x128xf32> -> vector<16x128xf32>
    %7 = arith.addf %3, %6 : vector<16x128xf32>
    %c0_6 = arith.constant 0 : index
    %c0_7 = arith.constant 0 : index
    %8 = vector.load %arg7[%c0_6, %c0_7] : memref<16x128xf32, #tpu.memory_space<vmem>>, vector<16x128xf32>
    tpu.vector_store %arg7[%c0_6, %c0_7], %7 {strides = array<i32>} : memref<16x128xf32, #tpu.memory_space<vmem>>, vector<16x128xf32>,
    %c1_i32 = arith.constant 1 : i32
    %9 = arith.cmpi eq, %arg2, %c1_i32 : i32
    %10 = arith.extui %9 : i1 to i32
    %c0_i32_8 = arith.constant 0 : i32
    %11 = arith.cmpi ne, %10, %c0_i32_8 : i32
    scf.if %11 {
      %c0_9 = arith.constant 0 : index
      %c0_10 = arith.constant 0 : index
      %12 = vector.load %arg7[%c0_9, %c0_10] : memref<16x128xf32, #tpu.memory_space<vmem>>, vector<16x128xf32>
      %cst_11 = arith.constant 0.00111803401 : f32
      %13 = vector.broadcast %cst_11 : f32 to vector<16x128xf32>
      %14 = arith.mulf %12, %13 : vector<16x128xf32>
      %c0_12 = arith.constant 0 : index
      %c0_13 = arith.constant 0 : index
      %15 = vector.load %arg5[%c0_12, %c0_13] : memref<1x128xf32, #tpu.memory_space<vmem>>, vector<1x128xf32>
      %16 = vector.broadcast %15 : vector<1x128xf32> to vector<16x128xf32>
      %17 = arith.addf %14, %16 : vector<16x128xf32>
      %cst_14 = arith.constant 0.000000e+00 : f32
      %18 = vector.broadcast %cst_14 : f32 to vector<16x128xf32>
      %19 = arith.cmpf oge, %17, %18 : vector<16x128xf32>
      %cst_15 = arith.constant 2.000000e-01 : f32
      %20 = vector.broadcast %cst_15 : f32 to vector<16x128xf32>
      %21 = arith.mulf %20, %17 : vector<16x128xf32>
      %22 = arith.select %19, %17, %21 : vector<16x128xi1>, vector<16x128xf32>
      %c0_16 = arith.constant 0 : index
      %c0_17 = arith.constant 0 : index
      %23 = vector.load %arg6[%c0_16, %c0_17] : memref<16x128xf32, #tpu.memory_space<vmem>>, vector<16x128xf32>
      tpu.vector_store %arg6[%c0_16, %c0_17], %22 {strides = array<i32>} : memref<16x128xf32, #tpu.memory_space<vmem>>, vector<16x128xf32>,
    } else {
    }
    return
  }
  func.func @transform_0(%arg0: i32, %arg1: i32, %arg2: i32) -> (i32, i32) {
    %c0_i32 = arith.constant 0 : i32
    return %arg0, %arg2 : i32, i32
  }
  func.func @transform_1(%arg0: i32, %arg1: i32, %arg2: i32) -> (i32, i32) {
    %c0_i32 = arith.constant 0 : i32
    return %arg2, %arg1 : i32, i32
  }
  func.func @transform_2(%arg0: i32, %arg1: i32, %arg2: i32) -> (i32, i32) {
    %c0_i32 = arith.constant 0 : i32
    %c0_i32_0 = arith.constant 0 : i32
    return %c0_i32, %arg1 : i32, i32
  }
  func.func @transform_3(%arg0: i32, %arg1: i32, %arg2: i32) -> (i32, i32) {
    %c0_i32 = arith.constant 0 : i32
    return %arg0, %arg1 : i32, i32
  }
}

</mosaic_0001>

<llo_original>
// kernel: tpu_custom_call.1
$region0: #{tpu_custom_call.1}
  #allocation0 [shape = 'u32[]', space=smem, size = 0x4, offset = 0x4, fixed_abs, tag = 'smem constant byte address 0x4 - core index']
  #allocation1 [shape = 'u32[144,128]{1,0:T(1,128)}', space=vmem, size = 0x12000, scoped, tag = 'internal scratch']
  #allocation2 [shape = 'f32[16,128]{1,0:T(8,128)}', space=vmem, size = 0x2000, scoped, tag = 'scratch operand']
  %s0 = inlined_call_operand.hbm [shape: f32[48,256], index: 0, kind: input, shape index: {}]
  %s1 = inlined_call_operand.hbm [shape: f32[256,384], index: 1, kind: input, shape index: {}]
  %s2 = inlined_call_operand.vmem [shape: f32[1,384], index: 2, kind: input, shape index: {}]
  %s3 = inlined_call_operand.hbm [shape: f32[48,384], index: 3, kind: output, shape index: {}]
  %s4 = sld [smem:[#allocation0]]
  $region61: #{tpu_custom_call.1} parent=0
    _
  %s6 = ssub.s32 1, %s4
  %s7 = scalar_select 0, %s6, %s4
  $region1: #{tpu_custom_call.1} parent=0
    #allocation3 [shape = 'u8[16384]{0}', space=vmem, size = 0x4000, scoped, tag = 'input window, operand 0']
    #allocation4 [shape = 's32[2]{0}', space=sflag, size = 0x8, scoped, tag = 'scoped memory for tpu_custom_call.1']
    #allocation5 [shape = 's32[2]{0}', space=sflag, size = 0x8, scoped, tag = 'scoped memory for tpu_custom_call.1']
    #allocation6 [shape = 'u8[131072]{0}', space=vmem, size = 0x20000, scoped, tag = 'input window, operand 1']
    #allocation7 [shape = 's32[2]{0}', space=sflag, size = 0x8, scoped, tag = 'scoped memory for tpu_custom_call.1']
    #allocation8 [shape = 'u8[16384]{0}', space=vmem, size = 0x4000, scoped, tag = 'output window, operand 0']
    %8 = vsyncpa [#allocation4], 0
    %s9 = scalar_lea.sflag [#allocation4], 1
    %10 = vsyncpa %s9, 0
    %11 = vsyncpa [#allocation7], 0
    %s12 = scalar_lea.sflag [#allocation7], 1
    %13 = vsyncpa %s12, 0
    %14 = vsyncpa [#allocation5], 0
    %s15 = scalar_lea.sflag [#allocation5], 1
    %16 = vsyncpa %s15, 0
    loop: start=0, step=1, limit=20
    $region2: #{tpu_custom_call.1} parent=1 // loop_pre_header
      _
    $region3: #{tpu_custom_call.1} parent=1 // loop_header
      %s18 = sphi 0, %s22
      %p19 = scmp.ge.s32.totalorder %s18, 20
      %s25 = sphi 0, %s44
      %s26 = sphi 0, %s40
      %s27 = sphi 0, %s36
      %s28 = sphi 0, %s25
      %s29 = sphi 0, %s26
      %s30 = sphi 0, %s27
      %s31 = sphi 0, %s28
      %s32 = sphi 0, %s29
      %s33 = sphi 0, %s30
      %s49 = sphi 0, %s51
      %s52 = sphi 0, %s49
      %s53 = sphi 0, %s52
      %s69 = sphi 0, %s53
      %s77 = sphi 0, %s79
      %s80 = sphi 0, %s77
      %s81 = sphi 0, %s80
      %s97 = sphi 0, %s81
      %s103 = sphi 0, %s105
      %s106 = sphi 0, %s103
      %s107 = sphi 0, %s106
      %s123 = sphi 0, %s107
      %s131 = sphi 0, %s133
      %s134 = sphi 0, %s131
      %s135 = sphi 0, %s134
      %s151 = sphi 0, %s135
    $region4: #{tpu_custom_call.1} parent=1 // loop_header_branch
      %21 = sbr.rel (%p19) target = $region8
    $region5: #{tpu_custom_call.1} parent=1 // loop_body
      %s23 = ssub.s32 %s18, 1
      %s24 = ssub.s32 %s18, 2
      %s34 = sadd.s32 1, %s27
      %p35 = scmp.ge.s32.totalorder %s34, 2
      %s36 = scalar_select %p35, 0, %s34
      %s37 = sadd.s32 1, %s26
      %s38 = scalar_select %p35, %s37, %s26
      %p39 = scmp.ge.s32.totalorder %s38, 3
      %s40 = scalar_select %p39, 0, %s38
      %s41 = sadd.s32 1, %s25
      %s42 = scalar_select %p39, %s41, %s25
      %p43 = scmp.ge.s32.totalorder %s42, 3
      %s44 = scalar_select %p43, 0, %s42
      %s45 = ssub.s32 %s25, %s44
      %s46 = ssub.s32 %s27, %s36
      %s47 = sor.u32 %s45, %s46
      %p48 = scmp.eq.s32.totalorder %s47, 0
      %s50 = sadd.s32 %s49, 1
      %s51 = scalar_select %p48, %s49, %s50
      %p54 = pneg %p48
      %p55 = scmp.eq.s32.totalorder %s18, 17
      %p56 = por %p54, %p55
      %p57 = scmp.ne.s32.totalorder %s49, %s52
      %p58 = scmp.eq.s32.totalorder %s18, 0
      %p59 = por %p57, %p58
      %p60 = scmp.ne.s32.totalorder %s49, %s52
      %p61 = scmp.eq.s32.totalorder %s23, 17
      %p62 = por %p60, %p61
      %p63 = scmp.ne.s32.totalorder %s52, %s53
      %p64 = scmp.eq.s32.totalorder %s23, 0
      %p65 = por %p63, %p64
      %p66 = scmp.ne.s32.totalorder %s52, %s53
      %p67 = scmp.eq.s32.totalorder %s24, 17
      %p68 = por %p66, %p67
      %p70 = scmp.ne.s32.totalorder %s53, %s69
      %p71 = scmp.eq.s32.totalorder %s24, 0
      %p72 = por %p70, %p71
      %s73 = ssub.s32 %s27, %s36
      %s74 = ssub.s32 %s26, %s40
      %s75 = sor.u32 %s73, %s74
      %p76 = scmp.eq.s32.totalorder %s75, 0
      %s78 = sadd.s32 %s77, 1
      %s79 = scalar_select %p76, %s77, %s78
      %p82 = pneg %p76
      %p83 = scmp.eq.s32.totalorder %s18, 17
      %p84 = por %p82, %p83
      %p85 = scmp.ne.s32.totalorder %s77, %s80
      %p86 = scmp.eq.s32.totalorder %s18, 0
      %p87 = por %p85, %p86
      %p88 = scmp.ne.s32.totalorder %s77, %s80
      %p89 = scmp.eq.s32.totalorder %s23, 17
      %p90 = por %p88, %p89
      %p91 = scmp.ne.s32.totalorder %s80, %s81
      %p92 = scmp.eq.s32.totalorder %s23, 0
      %p93 = por %p91, %p92
      %p94 = scmp.ne.s32.totalorder %s80, %s81
      %p95 = scmp.eq.s32.totalorder %s24, 17
      %p96 = por %p94, %p95
      %p98 = scmp.ne.s32.totalorder %s81, %s97
      %p99 = scmp.eq.s32.totalorder %s24, 0
      %p100 = por %p98, %p99
      %s101 = ssub.s32 %s26, %s40
      %p102 = scmp.eq.s32.totalorder %s101, 0
      %s104 = sadd.s32 %s103, 1
      %s105 = scalar_select %p102, %s103, %s104
      %p108 = pneg %p102
      %p109 = scmp.eq.s32.totalorder %s18, 17
      %p110 = por %p108, %p109
      %p111 = scmp.ne.s32.totalorder %s103, %s106
      %p112 = scmp.eq.s32.totalorder %s18, 0
      %p113 = por %p111, %p112
      %p114 = scmp.ne.s32.totalorder %s103, %s106
      %p115 = scmp.eq.s32.totalorder %s23, 17
      %p116 = por %p114, %p115
      %p117 = scmp.ne.s32.totalorder %s106, %s107
      %p118 = scmp.eq.s32.totalorder %s23, 0
      %p119 = por %p117, %p118
      %p120 = scmp.ne.s32.totalorder %s106, %s107
      %p121 = scmp.eq.s32.totalorder %s24, 17
      %p122 = por %p120, %p121
      %p124 = scmp.ne.s32.totalorder %s107, %s123
      %p125 = scmp.eq.s32.totalorder %s24, 0
      %p126 = por %p124, %p125
      %s127 = ssub.s32 %s25, %s44
      %s128 = ssub.s32 %s26, %s40
      %s129 = sor.u32 %s127, %s128
      %p130 = scmp.eq.s32.totalorder %s129, 0
      %s132 = sadd.s32 %s131, 1
      %s133 = scalar_select %p130, %s131, %s132
      %p136 = pneg %p130
      %p137 = scmp.eq.s32.totalorder %s18, 17
      %p138 = por %p136, %p137
      %p139 = scmp.ne.s32.totalorder %s131, %s134
      %p140 = scmp.eq.s32.totalorder %s18, 0
      %p141 = por %p139, %p140
      %p142 = scmp.ne.s32.totalorder %s131, %s134
      %p143 = scmp.eq.s32.totalorder %s23, 17
      %p144 = por %p142, %p143
      %p145 = scmp.ne.s32.totalorder %s134, %s135
      %p146 = scmp.eq.s32.totalorder %s23, 0
      %p147 = por %p145, %p146
      %p148 = scmp.ne.s32.totalorder %s134, %s135
      %p149 = scmp.eq.s32.totalorder %s24, 17
      %p150 = por %p148, %p149
      %p152 = scmp.ne.s32.totalorder %s135, %s151
      %p153 = scmp.eq.s32.totalorder %s24, 0
      %p154 = por %p152, %p153
      %p155 = scmp.le.s32.totalorder 1, %s18
      %p156 = scmp.lt.s32.totalorder %s18, 19
      %p157 = pnand %p155, %p156
      %p158 = pneg %p157
      // Predicated region
      $region9: #{tpu_custom_call.1} parent=5 // pred_check
        _
      $region10: #{tpu_custom_call.1} parent=5 // pred_check_branch
        %160 = sbr.rel (%p157) target = $region12
      $region11: #{tpu_custom_call.1} parent=5 // pred_region
        %s161 = ssub.s32 %s18, 1
      $region12: #{tpu_custom_call.1} parent=5 // pred_fallthru
        _
      %p162 = scmp.lt.s32.totalorder %s18, 18
      // Predicated region
      $region13: #{tpu_custom_call.1} parent=5 // pred_check
        %p163 = pneg %p162
      $region14: #{tpu_custom_call.1} parent=5 // pred_check_branch
        %165 = sbr.rel (%p163) target = $region16
      $region15: #{tpu_custom_call.1} parent=5 // pred_region
        // Predicated region
        $region17: #{tpu_custom_call.1} parent=15 // pred_check
          %p166 = pneg %p59
        $region18: #{tpu_custom_call.1} parent=15 // pred_check_branch
          %168 = sbr.rel (%p166) target = $region20
        $region19: #{tpu_custom_call.1} parent=15 // pred_region
          %s169 = sand.u32 %s49, 1
          %s170 = scalar_lea.sflag [#allocation4], %s169
          %s171 = sand.u32 %s49, 1
          %s172 = smul.addr %s171, 16
          %s173 = scalar_lea.vmem [#allocation3], %s172
          %s174 = smul.u32 2, %s25
          %s176 = ssub.s32 256, 256
          %177 = vsyncadd %s170, %s176
          %s178 = smul.addr %s174, 2
          %s179 = sadd.s32 %s27, %s178
          %s180 = smul.addr %s179, 128
          %s181 = scalar_lea.hbm %s0, %s180
          %s182 = sshll.u32 %s173, 4
          %s183 = int_to_ptr.vmem [resolvable:$true] %s182
          %188 = dma.hbm_to_vmem [thread:$0]  %s181, 256, %s183, %s170, 256, 128, 8
        $region20: #{tpu_custom_call.1} parent=15 // pred_fallthru
          _
        // Predicated region
        $region21: #{tpu_custom_call.1} parent=15 // pred_check
          %p189 = pneg %p87
        $region22: #{tpu_custom_call.1} parent=15 // pred_check_branch
          %191 = sbr.rel (%p189) target = $region24
        $region23: #{tpu_custom_call.1} parent=15 // pred_region
          %s192 = sand.u32 %s77, 1
          %s193 = scalar_lea.sflag [#allocation7], %s192
          %s194 = sand.u32 %s77, 1
          %s195 = smul.addr %s194, 128
          %s196 = scalar_lea.vmem [#allocation6], %s195
          %s197 = smul.u32 16, %s27
          %s199 = ssub.s32 2048, 2048
          %200 = vsyncadd %s193, %s199
          %s201 = smul.addr %s197, 3
          %s202 = sadd.s32 %s26, %s201
          %s203 = smul.addr %s202, 128
          %s204 = scalar_lea.hbm %s1, %s203
          %s205 = sshll.u32 %s196, 4
          %s206 = int_to_ptr.vmem [resolvable:$true] %s205
          %211 = dma.hbm_to_vmem [thread:$0]  %s204, 2048, %s206, %s193, 384, 128, 8
        $region24: #{tpu_custom_call.1} parent=15 // pred_fallthru
          _
        // Predicated region
        $region25: #{tpu_custom_call.1} parent=15 // pred_check
          %p212 = pneg %p113
        $region26: #{tpu_custom_call.1} parent=15 // pred_check_branch
          %214 = sbr.rel (%p212) target = $region28
        $region27: #{tpu_custom_call.1} parent=15 // pred_region
          %p215 = scmp.lt.s32.totalorder %s26, 2
          %s216 = scalar_select %p215, %s26, 2
          %s217 = scalar_lea.vmem %s2, %s216
        $region28: #{tpu_custom_call.1} parent=15 // pred_fallthru
          _
      $region16: #{tpu_custom_call.1} parent=5 // pred_fallthru
        _
      %p218 = scmp.le.s32.totalorder 1, %s18
      %p219 = scmp.lt.s32.totalorder %s18, 19
      %p220 = pnand %p218, %p219
      %p221 = pneg %p220
      // Predicated region
      $region29: #{tpu_custom_call.1} parent=5 // pred_check
        _
      $region30: #{tpu_custom_call.1} parent=5 // pred_check_branch
        %223 = sbr.rel (%p220) target = $region32
      $region31: #{tpu_custom_call.1} parent=5 // pred_region
        %s224 = ssub.s32 %s18, 1
        %s225 = sand.u32 %s52, 1
        %s226 = scalar_lea.sflag [#allocation4], %s225
        %s227 = sand.u32 %s52, 1
        %s228 = smul.addr %s227, 16
        %s229 = scalar_lea.vmem [#allocation3], %s228
        // Predicated region
        $region33: #{tpu_custom_call.1} parent=31 // pred_check
          %p230 = pneg %p65
        $region34: #{tpu_custom_call.1} parent=31 // pred_check_branch
          %232 = sbr.rel (%p230) target = $region36
        $region35: #{tpu_custom_call.1} parent=31 // pred_region
          %233 = dma.done %s226, 256
        $region36: #{tpu_custom_call.1} parent=31 // pred_fallthru
          _
        %s234 = sand.u32 %s80, 1
        %s235 = scalar_lea.sflag [#allocation7], %s234
        %s236 = sand.u32 %s80, 1
        %s237 = smul.addr %s236, 128
        %s238 = scalar_lea.vmem [#allocation6], %s237
        // Predicated region
        $region37: #{tpu_custom_call.1} parent=31 // pred_check
          %p239 = pneg %p93
        $region38: #{tpu_custom_call.1} parent=31 // pred_check_branch
          %241 = sbr.rel (%p239) target = $region40
        $region39: #{tpu_custom_call.1} parent=31 // pred_region
          %242 = dma.done %s235, 2048
        $region40: #{tpu_custom_call.1} parent=31 // pred_fallthru
          _
        %s243 = sand.u32 %s52, 1
        %s244 = scalar_lea.sflag [#allocation4], %s243
        %s245 = sand.u32 %s52, 1
        %s246 = smul.addr %s245, 16
        %s247 = scalar_lea.vmem [#allocation3], %s246
        %p248 = pneg %p65
        %p249 = pneg %p62
        %s250 = sand.u32 %s80, 1
        %s251 = scalar_lea.sflag [#allocation7], %s250
        %s252 = sand.u32 %s80, 1
        %s253 = smul.addr %s252, 128
        %s254 = scalar_lea.vmem [#allocation6], %s253
        %p255 = pneg %p93
        %p256 = pneg %p90
        %p257 = scmp.lt.s32.totalorder %s29, 2
        %s258 = scalar_select %p257, %s29, 2
        %s259 = scalar_lea.vmem %s2, %s258
        %p260 = pneg %p119
        %p261 = pneg %p116
        %p262 = pneg %p147
        %p263 = pneg %p144
        %s264 = sand.u32 %s134, 1
        %s265 = scalar_lea.sflag [#allocation5], %s264
        %s266 = sand.u32 %s134, 1
        %s267 = smul.addr %s266, 16
        %s268 = scalar_lea.vmem [#allocation8], %s267
        %s269 = smul.u32 2, %s28
        %s270 = smul.u32 16, %s30
        %p271 = scmp.lt.s32.totalorder %s29, 2
        %s272 = scalar_select %p271, %s29, 2
        %s273 = scalar_lea.vmem %s2, %s272
        %s274 = smul.u32 2, %s28
        %p275 = scmp.eq.s32.totalorder %s30, 0
        // Predicated region
        $region41: #{tpu_custom_call.1} parent=31 // pred_check
          %p276 = pneg %p275
        $region42: #{tpu_custom_call.1} parent=31 // pred_check_branch
          %278 = sbr.rel (%p276) target = $region44
        $region43: #{tpu_custom_call.1} parent=31 // pred_region
          %279 = vst [vmem:[#allocation2] sm:$0xff] 0.0
          %280 = vst [vmem:[#allocation2 + $0x8] sm:$0xff] 0.0
        $region44: #{tpu_custom_call.1} parent=31 // pred_fallthru
          _
        %v281 = vld [vmem:[#allocation2] sm:$0xff]
        %v282 = vld [vmem:[#allocation2 + $0x8] sm:$0xff]
        %v283 = vld [vmem:[%s229] sm:$0xff]
        %v284 = vld [vmem:[%s229 + $0x8] sm:$0xff]
        %v285 = vld [vmem:[%s238] sm:$0xff]
        %v286 = vld [vmem:[%s238 + $0x8] sm:$0xff]
        %v287 = vld [vmem:[%s238 + $0x10] sm:$0xff]
        %v288 = vld [vmem:[%s238 + $0x18] sm:$0xff]
        %v289 = vld [vmem:[%s238 + $0x20] sm:$0xff]
        %v290 = vld [vmem:[%s238 + $0x28] sm:$0xff]
        %v291 = vld [vmem:[%s238 + $0x30] sm:$0xff]
        %v292 = vld [vmem:[%s238 + $0x38] sm:$0xff]
        %v293 = vld [vmem:[%s238 + $0x40] sm:$0xff]
        %v294 = vld [vmem:[%s238 + $0x48] sm:$0xff]
        %v295 = vld [vmem:[%s238 + $0x50] sm:$0xff]
        %v296 = vld [vmem:[%s238 + $0x58] sm:$0xff]
        %v297 = vld [vmem:[%s238 + $0x60] sm:$0xff]
        %v298 = vld [vmem:[%s238 + $0x68] sm:$0xff]
        %v299 = vld [vmem:[%s238 + $0x70] sm:$0xff]
        %v300 = vld [vmem:[%s238 + $0x78] sm:$0xff]
        %301 = vmatprep.subr.mxu0 0.0
        %302 = vmatpush1.msra.mxu0 %v285
        %303 = vmatprep.subr.mxu0 0.0
        %304 = vmatpush1.msra.mxu0 %v286
        %305 = vmatprep.subr.mxu0 0.0
        %306 = vmatpush1.msra.mxu0 %v287
        %307 = vmatprep.subr.mxu0 0.0
        %308 = vmatpush1.msra.mxu0 %v288
        %309 = vmatprep.subr.mxu0 0.0
        %310 = vmatpush1.msra.mxu0 %v289
        %311 = vmatprep.subr.mxu0 0.0
        %312 = vmatpush1.msra.mxu0 %v290
        %313 = vmatprep.subr.mxu0 0.0
        %314 = vmatpush1.msra.mxu0 %v291
        %315 = vmatprep.subr.mxu0 0.0
        %316 = vmatpush1.msra.mxu0 %v292
        %317 = vmatprep.subr.mxu0 0.0
        %318 = vmatpush1.msra.mxu0 %v293
        %319 = vmatprep.subr.mxu0 0.0
        %320 = vmatpush1.msra.mxu0 %v294
        %321 = vmatprep.subr.mxu0 0.0
        %322 = vmatpush1.msra.mxu0 %v295
        %323 = vmatprep.subr.mxu0 0.0
        %324 = vmatpush1.msra.mxu0 %v296
        %325 = vmatprep.subr.mxu0 0.0
        %326 = vmatpush1.msra.mxu0 %v297
        %327 = vmatprep.subr.mxu0 0.0
        %328 = vmatpush1.msra.mxu0 %v298
        %329 = vmatprep.subr.mxu0 0.0
        %330 = vmatpush1.msra.mxu0 %v299
        %331 = vmatprep.subr.mxu0 0.0
        %332 = vmatpush1.msra.mxu0 %v300
        %333 = vmatprep.subr.mxu0 0.0
        %334 = vmatpush1.msra.mxu0 0.0
        %335 = vmatprep.subr.mxu0 0.0
        %336 = vmatpush1.msra.mxu0 0.0
        %337 = vmatprep.subr.mxu0 0.0
        %338 = vmatpush1.msra.mxu0 0.0
        %339 = vmatprep.subr.mxu0 0.0
        %340 = vmatpush1.msra.mxu0 0.0
        %341 = vmatprep.subr.mxu0 0.0
        %342 = vmatpush1.msra.mxu0 0.0
        %343 = vmatprep.subr.mxu0 0.0
        %344 = vmatpush1.msra.mxu0 0.0
        %345 = vmatprep.subr.mxu0 0.0
        %346 = vmatpush1.msra.mxu0 0.0
        %347 = vmatprep.subr.mxu0 0.0
        %348 = vmatpush1.msra.mxu0 0.0
        %349 = vmatprep.subr.mxu0 0.0
        %350 = vmatpush1.msra.mxu0 0.0
        %351 = vmatprep.subr.mxu0 0.0
        %352 = vmatpush1.msra.mxu0 0.0
        %353 = vmatprep.subr.mxu0 0.0
        %354 = vmatpush1.msra.mxu0 0.0
        %355 = vmatprep.subr.mxu0 0.0
        %356 = vmatpush1.msra.mxu0 0.0
        %357 = vmatprep.subr.mxu0 0.0
        %358 = vmatpush1.msra.mxu0 0.0
        %359 = vmatprep.subr.mxu0 0.0
        %360 = vmatpush1.msra.mxu0 0.0
        %361 = vmatprep.subr.mxu0 0.0
        %362 = vmatpush1.msra.mxu0 0.0
        %363 = vmatprep.subr.mxu0 0.0
        %364 = vmatpush1.msra.mxu0 0.0
        %365 = vmatprep.mubr.f32.mxu0 0.0
        %366 = vmatmul.mubr.f32.gmra.mrb[0].mxu0 %v283
        %v367 = vpop.f32.mrb[0].mxu0
        %v368 = vadd.f32 0.0, %v367
        %v369 = vpop.f32.mrb[0].mxu0
        %370 = vmatprep.mubr.f32.mxu0 0.0
        %371 = vmatmul.mubr.f32.gmra.mrb[0].mxu0 %v284
        %v372 = vpop.f32.mrb[0].mxu0
        %v373 = vadd.f32 0.0, %v372
        %v374 = vpop.f32.mrb[0].mxu0
        %375 = vdwg.mxu0
        %v376 = vadd.f32 %v281, %v368
        %v377 = vadd.f32 %v282, %v373
        %378 = vst [vmem:[#allocation2] sm:$0xff] %v376
        %379 = vst [vmem:[#allocation2 + $0x8] sm:$0xff] %v377
        %p380 = scmp.eq.s32.totalorder %s30, 1
        // Predicated region
        $region45: #{tpu_custom_call.1} parent=31 // pred_check
          %p381 = pneg %p380
        $region46: #{tpu_custom_call.1} parent=31 // pred_check_branch
          %383 = sbr.rel (%p381) target = $region48
        $region47: #{tpu_custom_call.1} parent=31 // pred_region
          %v384 = vld [vmem:[#allocation2] sm:$0xff]
          %v385 = vld [vmem:[#allocation2 + $0x8] sm:$0xff]
          %v386 = vmul.f32 %v384, 0.001118034
          %v387 = vmul.f32 %v385, 0.001118034
          %v388 = vld [vmem:[%s273] sm:$0x1]
          %v390 = vlaneseq
          %v391 = vshrl.u32 %v390, 7
          %v392 = vsub.s32 0, %v391
          %v393 = vrot.slane %v388, %v392
          %v395 = vadd.f32 %v386, %v393
          %v396 = vadd.f32 %v387, %v393
          %vm397 = vcmp.ge.f32.partialorder %v395, 0.0
          %vm398 = vcmp.ge.f32.partialorder %v396, 0.0
          %v399 = vmul.f32 %v395, 0.2
          %v400 = vmul.f32 %v396, 0.2
          %v401 = vsel %vm397, %v395, %v399
          %v402 = vsel %vm398, %v396, %v400
          %403 = vst [vmem:[%s268] sm:$0xff] %v401
          %404 = vst [vmem:[%s268 + $0x8] sm:$0xff] %v402
        $region48: #{tpu_custom_call.1} parent=31 // pred_fallthru
          _
        %s405 = sand.u32 %s134, 1
        %s406 = scalar_lea.sflag [#allocation5], %s405
        %s407 = sand.u32 %s134, 1
        %s408 = smul.addr %s407, 16
        %s409 = scalar_lea.vmem [#allocation8], %s408
        // Predicated region
        $region49: #{tpu_custom_call.1} parent=31 // pred_check
          %p410 = pneg %p144
        $region50: #{tpu_custom_call.1} parent=31 // pred_check_branch
          %412 = sbr.rel (%p410) target = $region52
        $region51: #{tpu_custom_call.1} parent=31 // pred_region
          %s413 = smul.u32 2, %s28
          %s415 = ssub.s32 256, 256
          %416 = vsyncadd %s406, %s415
          %s417 = smul.addr %s413, 3
          %s418 = sadd.s32 %s29, %s417
          %s419 = smul.addr %s418, 128
          %s420 = scalar_lea.hbm %s3, %s419
          %s421 = sshll.u32 %s409, 4
          %s422 = int_to_ptr.vmem [resolvable:$true] %s421
          %427 = dma.vmem_to_hbm [thread:$0]  %s422, 256, %s420, %s406, 128, 384, 8
        $region52: #{tpu_custom_call.1} parent=31 // pred_fallthru
          _
      $region32: #{tpu_custom_call.1} parent=5 // pred_fallthru
        _
      %p428 = scmp.le.s32.totalorder 2, %s18
      // Predicated region
      $region53: #{tpu_custom_call.1} parent=5 // pred_check
        %p429 = pneg %p428
      $region54: #{tpu_custom_call.1} parent=5 // pred_check_branch
        %431 = sbr.rel (%p429) target = $region56
      $region55: #{tpu_custom_call.1} parent=5 // pred_region
        %s432 = ssub.s32 %s18, 2
        // Predicated region
        $region57: #{tpu_custom_call.1} parent=55 // pred_check
          %p433 = pneg %p150
        $region58: #{tpu_custom_call.1} parent=55 // pred_check_branch
          %435 = sbr.rel (%p433) target = $region60
        $region59: #{tpu_custom_call.1} parent=55 // pred_region
          %s436 = sand.u32 %s135, 1
          %s437 = scalar_lea.sflag [#allocation5], %s436
          %s438 = sand.u32 %s135, 1
          %s439 = smul.addr %s438, 16
          %s440 = scalar_lea.vmem [#allocation8], %s439
          %441 = dma.done %s437, 256
        $region60: #{tpu_custom_call.1} parent=55 // pred_fallthru
          _
      $region56: #{tpu_custom_call.1} parent=5 // pred_fallthru
        _
    $region6: #{tpu_custom_call.1} parent=1 // loop_footer
      %s22 = sadd.s32 1, %s18
    $region7: #{tpu_custom_call.1} parent=1 // loop_footer_branch
      %17 = sbr.rel target = $region3
    $region8: #{tpu_custom_call.1} parent=1 // loop_exit
      _
    %442 = vsyncpa [#allocation4], 1
    %s443 = scalar_lea.sflag [#allocation4], 1
    %444 = vsyncpa %s443, 1
    %445 = vsyncpa [#allocation7], 1
    %s446 = scalar_lea.sflag [#allocation7], 1
    %447 = vsyncpa %s446, 1
    %448 = vsyncpa [#allocation5], 1
    %s449 = scalar_lea.sflag [#allocation5], 1
    %450 = vsyncpa %s449, 1

</llo_original>
